<compile_context>
chip_gen: v6e
topology: v6e:2x2x1
jax: 0.10.0
libtpu: 0.0.40
codegen_flags: <defaults>
</compile_context>

<pallas_src>
import functools

import jax
import jax.numpy as jnp
from jax import lax
from jax.experimental import pallas as pl
from jax.experimental.pallas import tpu as pltpu

NEG_SLOPE = 0.01  # torch.nn.LeakyReLU default


def _leaky_relu(x):
    return jnp.where(x > 0, x, NEG_SLOPE * x)


def mlp_kernel(x_ref, w1_ref, b1_ref, w2_ref, b2_ref, w3d_ref, b3d_ref, o_ref,
               *, chunk, n_chunks):
    # Weights are tiny; constant-index BlockSpecs keep them VMEM-resident.
    w1 = w1_ref[...]            # (H1, F)  bf16
    b1 = b1_ref[...]            # (H1, 1)  f32
    w2 = w2_ref[...]            # (H2, H1) bf16
    b2 = b2_ref[...]            # (H2, 1)  f32
    w3d = w3d_ref[...]          # (1, H2)  bf16
    b3d = b3d_ref[0]            # scalar (SMEM)

    def body(c, carry):
        start = pl.multiple_of(c * chunk, chunk)
        x_c = x_ref[pl.ds(start, chunk), :]                        # (chunk, F) bf16

        # Layer 1 in transposed orientation: (H1, F) x (chunk, F)^T -> (H1, chunk).
        h1 = lax.dot_general(w1, x_c, (((1,), (1,)), ((), ())),
                             preferred_element_type=jnp.float32)
        h1 = _leaky_relu(h1 + b1).astype(jnp.bfloat16)             # (H1, chunk)

        # Layer 2: (H2, H1) @ (H1, chunk) -> (H2, chunk), f32 acc.
        h2 = jnp.dot(w2, h1, preferred_element_type=jnp.float32)
        h2 = _leaky_relu(h2 + b2).astype(jnp.bfloat16)             # (H2, chunk)

        # Layer 3 + 2-class softmax as sigmoids of the logit difference.
        d = jnp.dot(w3d, h2, preferred_element_type=jnp.float32) + b3d   # (1, chunk)
        p1 = 1.0 / (1.0 + jnp.exp(-d))      # exact (review: avoid approx recip)
        p0 = 1.0 / (1.0 + jnp.exp(d))       # sigmoid(-d): no 1-p1 cancellation

        probs = jnp.concatenate([p0, p1], axis=0)                  # (2, chunk)
        o_ref[:, pl.ds(start, chunk)] = probs.astype(o_ref.dtype)
        return carry

    unroll = n_chunks if n_chunks <= 4 else 2
    lax.fori_loop(0, n_chunks, body, 0, unroll=unroll)


def _choose_tb(b_pad, tb_target, prefer_multi_step):
    """Largest multiple of 128 that divides b_pad, <= tb_target, and (if possible)
    leaves at least 2 grid steps so both v7x TensorCores get work."""
    n128 = b_pad // 128
    k_max = max(1, min(tb_target // 128, n128))
    if prefer_multi_step and n128 >= 2:
        k_max = max(1, min(k_max, n128 // 2))
    for k in range(k_max, 0, -1):
        if n128 % k == 0:
            return 128 * k
    return 128


@functools.partial(
    jax.jit, static_argnames=("tb_target", "compute_dtype", "prefer_multi_step"))
def is_vacinated_forward(x, w1, b1, w2, b2, w3, b3, *, tb_target=2048,
                         compute_dtype=jnp.bfloat16, prefer_multi_step=True):
    """Forward pass of the IsVacinated module.

    x: (B, F) float32.  Weights/biases in torch.nn.Linear layout:
      w1 (64, F), b1 (64,), w2 (16, 64), b2 (16,), w3 (2, 16), b3 (2,).
    Returns (B, 2) float32 softmax probabilities.
    """
    B, F = x.shape
    H1 = w1.shape[0]
    H2 = w2.shape[0]

    # Pad only up to the next multiple of 128 (no pad when already aligned),
    # and pick a tile that divides the padded batch exactly.
    B_pad = ((B + 127) // 128) * 128
    tb = _choose_tb(B_pad, tb_target, prefer_multi_step)
    chunk = 256 if tb % 256 == 0 else 128
    chunk = min(chunk, tb)
    n_chunks = tb // chunk

    x_c = x.astype(compute_dtype)
    if B_pad != B:
        x_c = jnp.pad(x_c, ((0, B_pad - B), (0, 0)))

    # Parameter preprocessing (tiny, once per call under jit).
    w1_c = w1.astype(compute_dtype)                             # (H1, F)
    b1_2d = b1.reshape(H1, 1).astype(jnp.float32)               # (H1, 1)
    w2_c = w2.astype(compute_dtype)                             # (H2, H1)
    b2_2d = b2.reshape(H2, 1).astype(jnp.float32)               # (H2, 1)
    w3d = (w3[1] - w3[0]).reshape(1, H2).astype(compute_dtype)  # (1, H2)
    b3d = (b3[1] - b3[0]).reshape(1).astype(jnp.float32)        # (1,) SMEM scalar

    grid = (B_pad // tb,)

    flops = 2 * B_pad * (F * H1 + H1 * H2 + H2)
    bytes_accessed = int(
        x_c.size * x_c.dtype.itemsize
        + w1_c.size * w1_c.dtype.itemsize
        + w2_c.size * w2_c.dtype.itemsize
        + w3d.size * w3d.dtype.itemsize
        + (b1_2d.size + b2_2d.size + b3d.size) * 4
        + 2 * B_pad * 4)
    cost = pl.CostEstimate(flops=flops, transcendentals=2 * B_pad,
                           bytes_accessed=bytes_accessed)

    kernel = functools.partial(mlp_kernel, chunk=chunk, n_chunks=n_chunks)

    probs_t = pl.pallas_call(
        kernel,
        out_shape=jax.ShapeDtypeStruct((2, B_pad), jnp.float32),
        grid_spec=pl.GridSpec(
            grid=grid,
            in_specs=[
                pl.BlockSpec((tb, F), lambda i: (i, 0)),      # x tile (batch-major)
                pl.BlockSpec((H1, F), lambda i: (0, 0)),      # W1  (VMEM resident)
                pl.BlockSpec((H1, 1), lambda i: (0, 0)),      # b1
                pl.BlockSpec((H2, H1), lambda i: (0, 0)),     # W2
                pl.BlockSpec((H2, 1), lambda i: (0, 0)),      # b2
                pl.BlockSpec((1, H2), lambda i: (0, 0)),      # w3 diff row
                pl.BlockSpec(memory_space=pltpu.MemorySpace.SMEM),  # b3 diff scalar
            ],
            out_specs=pl.BlockSpec((2, tb), lambda i: (0, i)),  # lane-dense [p0;p1]
        ),
        compiler_params=pltpu.CompilerParams(
            dimension_semantics=("parallel",),
        ),
        cost_estimate=cost,
    )(x_c, w1_c, b1_2d, w2_c, b2_2d, w3d, b3d)

    # (2, B_pad) -> (B, 2); column order [class0, class1] matches torch Softmax.
    return probs_t[:, :B].T.astype(jnp.float32)


def init_linear_params(key, in_dim, out_dim):
    """torch.nn.Linear-style init: W (out, in), b (out,), U(-1/sqrt(in), 1/sqrt(in))."""
    kw, kb = jax.random.split(key)
    bound = 1.0 / jnp.sqrt(jnp.float32(in_dim))
    w = jax.random.uniform(kw, (out_dim, in_dim), jnp.float32, -bound, bound)
    b = jax.random.uniform(kb, (out_dim,), jnp.float32, -bound, bound)
    return w, b


def reference_forward(x, w1, b1, w2, b2, w3, b3):
    h1 = _leaky_relu(x @ w1.T + b1)
    h2 = _leaky_relu(h1 @ w2.T + b2)
    logits = h2 @ w3.T + b3
    return jax.nn.softmax(logits, axis=-1)


def matched_reference(x, w1, b1, w2, b2, w3, b3):
    """Pure-JAX reference replicating the kernel's bf16 rounding (x, W1, W2, w3d,
    h1, h2 in bf16; all accumulation in f32)."""
    f32 = jnp.float32
    xb = x.astype(jnp.bfloat16)
    w1b = w1.astype(jnp.bfloat16)
    h1 = _leaky_relu(jnp.dot(xb, w1b.T, preferred_element_type=f32) + b1)
    h1 = h1.astype(jnp.bfloat16)
    w2b = w2.astype(jnp.bfloat16)
    h2 = _leaky_relu(jnp.dot(h1, w2b.T, preferred_element_type=f32) + b2)
    h2 = h2.astype(jnp.bfloat16)
    w3d = (w3[1] - w3[0]).astype(jnp.bfloat16)
    b3d = (b3[1] - b3[0]).astype(f32)
    d = jnp.dot(h2, w3d[:, None], preferred_element_type=f32)[:, 0] + b3d
    return jnp.stack([jax.nn.sigmoid(-d), jax.nn.sigmoid(d)], axis=-1)


# TODO(synk): fit/predict/metrics (training loop, sklearn classification_report)
# are host-side training utilities, not part of the forward pass, and are not
# translated to Pallas.

if __name__ == "__main__":
    key = jax.random.PRNGKey(0)
    k_x, k1, k2, k3 = jax.random.split(key, 4)

    B, F = 256, 32   # small batch of feature vectors

    x = jax.random.normal(k_x, (B, F), jnp.float32)
    w1, b1 = init_linear_params(k1, F, 64)
    w2, b2 = init_linear_params(k2, 64, 16)
    w3, b3 = init_linear_params(k3, 16, 2)

    # With B=256 and prefer_multi_step=True the grid has 2 parallel steps
    # (both v7x TensorCores get work); no batch padding is materialized.
    y = is_vacinated_forward(x, w1, b1, w2, b2, w3, b3)
    y = jax.block_until_ready(y)
    assert y.shape == (B, 2)

    with jax.default_matmul_precision("highest"):
        y_matched = matched_reference(x, w1, b1, w2, b2, w3, b3)
        y_ref_f32 = reference_forward(x, w1, b1, w2, b2, w3, b3)

    assert jnp.allclose(y, y_matched, atol=5e-3, rtol=0.0), "mismatch vs matched reference"
    assert jnp.allclose(y, y_ref_f32, atol=3e-2, rtol=0.0), "mismatch vs f32 reference"
    assert jnp.allclose(jnp.sum(y, axis=-1), 1.0, atol=1e-5)

    print("KERNEL_OK")
</pallas_src>

<mosaic_0001>
module attributes {stable_mosaic.version = 11 : i64} {
  func.func @mlp_kernel(%arg0: i32, %arg1: memref<128x32xbf16, #tpu.memory_space<vmem>>, %arg2: memref<64x32xbf16, #tpu.memory_space<vmem>>, %arg3: memref<64x1xf32, #tpu.memory_space<vmem>>, %arg4: memref<16x64xbf16, #tpu.memory_space<vmem>>, %arg5: memref<16x1xf32, #tpu.memory_space<vmem>>, %arg6: memref<1x16xbf16, #tpu.memory_space<vmem>>, %arg7: memref<1xf32, #tpu.memory_space<smem>>, %arg8: memref<2x128xf32, #tpu.memory_space<vmem>>) attributes {dimension_semantics = [#tpu.dimension_semantics<parallel>], iteration_bounds = array<i64: 2>, scalar_prefetch = 0 : i64, scratch_operands = 0 : i64, tpu.core_type = #tpu.core_type<tc>, window_params = [{transform_indices = @transform_0, window_bounds = array<i64: 128, 32>}, {pipeline_mode = #tpu.pipeline_mode<synchronous>, transform_indices = @transform_1, window_bounds = array<i64: 64, 32>}, {pipeline_mode = #tpu.pipeline_mode<synchronous>, transform_indices = @transform_2, window_bounds = array<i64: 64, 1>}, {pipeline_mode = #tpu.pipeline_mode<synchronous>, transform_indices = @transform_3, window_bounds = array<i64: 16, 64>}, {pipeline_mode = #tpu.pipeline_mode<synchronous>, transform_indices = @transform_4, window_bounds = array<i64: 16, 1>}, {pipeline_mode = #tpu.pipeline_mode<synchronous>, transform_indices = @transform_5, window_bounds = array<i64: 1, 16>}, {transform_indices = @transform_6, window_bounds = array<i64: 1>}, {transform_indices = @transform_7, window_bounds = array<i64: 2, 128>}]} {
    %c0 = arith.constant 0 : index
    %c0_0 = arith.constant 0 : index
    %0 = vector.load %arg2[%c0, %c0_0] : memref<64x32xbf16, #tpu.memory_space<vmem>>, vector<64x32xbf16>
    %c0_1 = arith.constant 0 : index
    %c0_2 = arith.constant 0 : index
    %1 = vector.load %arg3[%c0_1, %c0_2] : memref<64x1xf32, #tpu.memory_space<vmem>>, vector<64x1xf32>
    %c0_3 = arith.constant 0 : index
    %c0_4 = arith.constant 0 : index
    %2 = vector.load %arg4[%c0_3, %c0_4] : memref<16x64xbf16, #tpu.memory_space<vmem>>, vector<16x64xbf16>
    %c0_5 = arith.constant 0 : index
    %c0_6 = arith.constant 0 : index
    %3 = vector.load %arg5[%c0_5, %c0_6] : memref<16x1xf32, #tpu.memory_space<vmem>>, vector<16x1xf32>
    %c0_7 = arith.constant 0 : index
    %c0_8 = arith.constant 0 : index
    %4 = vector.load %arg6[%c0_7, %c0_8] : memref<1x16xbf16, #tpu.memory_space<vmem>>, vector<1x16xbf16>
    %c0_9 = arith.constant 0 : index
    %5 = memref.load %arg7[%c0_9] : memref<1xf32, #tpu.memory_space<smem>>
    %c0_i32 = arith.constant 0 : i32
    %c128_i32 = arith.constant 128 : i32
    %6 = arith.muli %c0_i32, %c128_i32 : i32
    %7 = tpu.assume_multiple %6, 128 : i32
    %8 = arith.index_cast %7 : i32 to index
    %c0_10 = arith.constant 0 : index
    %9 = vector.load %arg1[%8, %c0_10] : memref<128x32xbf16, #tpu.memory_space<vmem>>, vector<128x32xbf16>
    %cst = arith.constant dense<0.000000e+00> : vector<64x128xf32>
    %10 = tpu.matmul %0, %9, %cst {dimension_numbers = #tpu.dot_dimension_numbers<[1], [1], [0], [0], [0, 0, 1, 0], [], []>} : vector<64x32xbf16>, vector<128x32xbf16>, vector<64x128xf32> -> vector<64x128xf32>
    %11 = vector.broadcast %1 : vector<64x1xf32> to vector<64x128xf32>
    %12 = arith.addf %10, %11 : vector<64x128xf32>
    %cst_11 = arith.constant 0.000000e+00 : f32
    %13 = vector.broadcast %cst_11 : f32 to vector<64x128xf32>
    %14 = arith.cmpf ogt, %12, %13 : vector<64x128xf32>
    %cst_12 = arith.constant 0.00999999977 : f32
    %15 = vector.broadcast %cst_12 : f32 to vector<64x128xf32>
    %16 = arith.mulf %15, %12 : vector<64x128xf32>
    %17 = arith.select %14, %12, %16 : vector<64x128xi1>, vector<64x128xf32>
    %18 = arith.truncf %17 : vector<64x128xf32> to vector<64x128xbf16>
    %cst_13 = arith.constant dense<0.000000e+00> : vector<16x128xf32>
    %19 = tpu.matmul %2, %18, %cst_13 {dimension_numbers = #tpu.dot_dimension_numbers<[1], [0], [0], [1], [0, 0, 1, 1], [], []>} : vector<16x64xbf16>, vector<64x128xbf16>, vector<16x128xf32> -> vector<16x128xf32>
    %20 = vector.broadcast %3 : vector<16x1xf32> to vector<16x128xf32>
    %21 = arith.addf %19, %20 : vector<16x128xf32>
    %cst_14 = arith.constant 0.000000e+00 : f32
    %22 = vector.broadcast %cst_14 : f32 to vector<16x128xf32>
    %23 = arith.cmpf ogt, %21, %22 : vector<16x128xf32>
    %cst_15 = arith.constant 0.00999999977 : f32
    %24 = vector.broadcast %cst_15 : f32 to vector<16x128xf32>
    %25 = arith.mulf %24, %21 : vector<16x128xf32>
    %26 = arith.select %23, %21, %25 : vector<16x128xi1>, vector<16x128xf32>
    %27 = arith.truncf %26 : vector<16x128xf32> to vector<16x128xbf16>
    %cst_16 = arith.constant dense<0.000000e+00> : vector<1x128xf32>
    %28 = tpu.matmul %4, %27, %cst_16 {dimension_numbers = #tpu.dot_dimension_numbers<[1], [0], [0], [1], [0, 0, 1, 1], [], []>} : vector<1x16xbf16>, vector<16x128xbf16>, vector<1x128xf32> -> vector<1x128xf32>
    %29 = vector.broadcast %5 : f32 to vector<1x128xf32>
    %30 = arith.addf %28, %29 : vector<1x128xf32>
    %cst_17 = arith.constant 0.000000e+00 : f32
    %31 = vector.broadcast %cst_17 : f32 to vector<1x128xf32>
    %32 = arith.subf %31, %30 : vector<1x128xf32>
    %33 = math.exp %32 : vector<1x128xf32>
    %cst_18 = arith.constant 1.000000e+00 : f32
    %34 = vector.broadcast %cst_18 : f32 to vector<1x128xf32>
    %35 = arith.addf %34, %33 : vector<1x128xf32>
    %cst_19 = arith.constant 1.000000e+00 : f32
    %36 = vector.broadcast %cst_19 : f32 to vector<1x128xf32>
    %37 = arith.divf %36, %35 : vector<1x128xf32>
    %38 = math.exp %30 : vector<1x128xf32>
    %cst_20 = arith.constant 1.000000e+00 : f32
    %39 = vector.broadcast %cst_20 : f32 to vector<1x128xf32>
    %40 = arith.addf %39, %38 : vector<1x128xf32>
    %cst_21 = arith.constant 1.000000e+00 : f32
    %41 = vector.broadcast %cst_21 : f32 to vector<1x128xf32>
    %42 = arith.divf %41, %40 : vector<1x128xf32>
    %43 = tpu.concatenate %42, %37 in 0 : vector<1x128xf32>, vector<1x128xf32> -> vector<2x128xf32>
    %c0_22 = arith.constant 0 : index
    %44 = arith.index_cast %7 : i32 to index
    %45 = vector.load %arg8[%c0_22, %44] : memref<2x128xf32, #tpu.memory_space<vmem>>, vector<2x128xf32>
    tpu.vector_store %arg8[%c0_22, %44], %43 {strides = array<i32>} : memref<2x128xf32, #tpu.memory_space<vmem>>, vector<2x128xf32>,
    %c1_i32 = arith.constant 1 : i32
    return
  }
  func.func @transform_0(%arg0: i32) -> (i32, i32) {
    %c0_i32 = arith.constant 0 : i32
    %c0_i32_0 = arith.constant 0 : i32
    return %arg0, %c0_i32 : i32, i32
  }
  func.func @transform_1(%arg0: i32) -> (i32, i32) {
    %c0_i32 = arith.constant 0 : i32
    %c0_i32_0 = arith.constant 0 : i32
    %c0_i32_1 = arith.constant 0 : i32
    return %c0_i32, %c0_i32_0 : i32, i32
  }
  func.func @transform_2(%arg0: i32) -> (i32, i32) {
    %c0_i32 = arith.constant 0 : i32
    %c0_i32_0 = arith.constant 0 : i32
    %c0_i32_1 = arith.constant 0 : i32
    return %c0_i32, %c0_i32_0 : i32, i32
  }
  func.func @transform_3(%arg0: i32) -> (i32, i32) {
    %c0_i32 = arith.constant 0 : i32
    %c0_i32_0 = arith.constant 0 : i32
    %c0_i32_1 = arith.constant 0 : i32
    return %c0_i32, %c0_i32_0 : i32, i32
  }
  func.func @transform_4(%arg0: i32) -> (i32, i32) {
    %c0_i32 = arith.constant 0 : i32
    %c0_i32_0 = arith.constant 0 : i32
    %c0_i32_1 = arith.constant 0 : i32
    return %c0_i32, %c0_i32_0 : i32, i32
  }
  func.func @transform_5(%arg0: i32) -> (i32, i32) {
    %c0_i32 = arith.constant 0 : i32
    %c0_i32_0 = arith.constant 0 : i32
    %c0_i32_1 = arith.constant 0 : i32
    return %c0_i32, %c0_i32_0 : i32, i32
  }
  func.func @transform_6(%arg0: i32) -> i32 {
    %c0_i32 = arith.constant 0 : i32
    %c0_i32_0 = arith.constant 0 : i32
    return %c0_i32 : i32
  }
  func.func @transform_7(%arg0: i32) -> (i32, i32) {
    %c0_i32 = arith.constant 0 : i32
    %c0_i32_0 = arith.constant 0 : i32
    return %c0_i32, %arg0 : i32, i32
  }
}

</mosaic_0001>

<llo_original>
// kernel: is_vacinated_forward.1
$region0: #{is_vacinated_forward.1}
  #allocation0 [shape = 'u32[]', space=smem, size = 0x4, offset = 0x4, fixed_abs, tag = 'smem constant byte address 0x4 - core index']
  #allocation1 [shape = 'u32[144,128]{1,0:T(1,128)}', space=vmem, size = 0x12000, scoped, tag = 'internal scratch']
  #allocation2 [shape = 'f32[1]{0:T(128)S(6)}', space=smem, size = 0x200, scoped, tag = 'scoped memory for is_vacinated_forward.1']
  %s0 = inlined_call_operand.vmem [shape: bf16[256,32], index: 0, kind: input, shape index: {}]
  %s1 = inlined_call_operand.vmem [shape: bf16[64,32], index: 1, kind: input, shape index: {}]
  %s2 = inlined_call_operand.vmem [shape: f32[64,1], index: 2, kind: input, shape index: {}]
  %s3 = inlined_call_operand.vmem [shape: bf16[16,64], index: 3, kind: input, shape index: {}]
  %s4 = inlined_call_operand.vmem [shape: f32[16,1], index: 4, kind: input, shape index: {}]
  %s5 = inlined_call_operand.vmem [shape: bf16[1,16], index: 5, kind: input, shape index: {}]
  %s6 = inlined_call_operand.<no memory space> [shape: f32[1], index: 6, kind: input, shape index: {}]
  %s7 = inlined_call_operand.hbm [shape: f32[2,256], index: 7, kind: output, shape index: {}]
  %s8 = sld [smem:[#allocation0]]
  $region61: #{is_vacinated_forward.1} parent=0
    _
  %s10 = ssub.s32 1, %s8
  %s11 = scalar_select 0, %s10, %s8
  %12 = sst [smem:[#allocation2]] %s6
  $region1: #{is_vacinated_forward.1} parent=0
    #allocation3 [shape = 'u8[2048]{0}', space=vmem, size = 0x800, scoped, tag = 'output window, operand 0']
    #allocation4 [shape = 's32[2]{0}', space=sflag, size = 0x8, scoped, tag = 'scoped memory for is_vacinated_forward.1']
    %13 = vsyncpa [#allocation4], 0
    %s14 = scalar_lea.sflag [#allocation4], 1
    %15 = vsyncpa %s14, 0
    loop: start=0, step=1, limit=4
    $region2: #{is_vacinated_forward.1} parent=1 // loop_pre_header
      _
    $region3: #{is_vacinated_forward.1} parent=1 // loop_header
      %s17 = sphi 0, %s21
      %p18 = scmp.ge.s32.totalorder %s17, 4
      %s27 = sphi 0, %s29
      %s30 = sphi 0, %s27
      %s31 = sphi 0, %s30
      %s47 = sphi 0, %s31
      %s51 = sphi 0, %s51
      %s53 = sphi 0, %s51
      %s54 = sphi 0, %s53
      %s68 = sphi 0, %s54
      %s72 = sphi 0, %s72
      %s74 = sphi 0, %s72
      %s75 = sphi 0, %s74
      %s89 = sphi 0, %s75
      %s93 = sphi 0, %s93
      %s95 = sphi 0, %s93
      %s96 = sphi 0, %s95
      %s110 = sphi 0, %s96
      %s114 = sphi 0, %s114
      %s116 = sphi 0, %s114
      %s117 = sphi 0, %s116
      %s131 = sphi 0, %s117
      %s135 = sphi 0, %s135
      %s137 = sphi 0, %s135
      %s138 = sphi 0, %s137
      %s152 = sphi 0, %s138
      %s156 = sphi 0, %s156
      %s158 = sphi 0, %s156
      %s159 = sphi 0, %s158
      %s173 = sphi 0, %s159
      %s179 = sphi 0, %s181
      %s182 = sphi 0, %s179
      %s183 = sphi 0, %s182
      %s199 = sphi 0, %s183
    $region4: #{is_vacinated_forward.1} parent=1 // loop_header_branch
      %20 = sbr.rel (%p18) target = $region8
    $region5: #{is_vacinated_forward.1} parent=1 // loop_body
      %s22 = ssub.s32 %s17, 1
      %s23 = ssub.s32 %s17, 2
      %s24 = sadd.s32 %s17, 1
      %s25 = ssub.s32 %s17, %s24
      %p26 = scmp.eq.s32.totalorder %s25, 0
      %s28 = sadd.s32 %s27, 1
      %s29 = scalar_select %p26, %s27, %s28
      %p32 = pneg %p26
      %p33 = scmp.eq.s32.totalorder %s17, 1
      %p34 = por %p32, %p33
      %p35 = scmp.ne.s32.totalorder %s27, %s30
      %p36 = scmp.eq.s32.totalorder %s17, 0
      %p37 = por %p35, %p36
      %p38 = scmp.ne.s32.totalorder %s27, %s30
      %p39 = scmp.eq.s32.totalorder %s22, 1
      %p40 = por %p38, %p39
      %p41 = scmp.ne.s32.totalorder %s30, %s31
      %p42 = scmp.eq.s32.totalorder %s22, 0
      %p43 = por %p41, %p42
      %p44 = scmp.ne.s32.totalorder %s30, %s31
      %p45 = scmp.eq.s32.totalorder %s23, 1
      %p46 = por %p44, %p45
      %p48 = scmp.ne.s32.totalorder %s31, %s47
      %p49 = scmp.eq.s32.totalorder %s23, 0
      %p50 = por %p48, %p49
      %s52 = sadd.s32 %s51, 1
      %p55 = scmp.eq.s32.totalorder %s17, 1
      %p56 = scmp.ne.s32.totalorder %s51, %s53
      %p57 = scmp.eq.s32.totalorder %s17, 0
      %p58 = por %p56, %p57
      %p59 = scmp.ne.s32.totalorder %s51, %s53
      %p60 = scmp.eq.s32.totalorder %s22, 1
      %p61 = por %p59, %p60
      %p62 = scmp.ne.s32.totalorder %s53, %s54
      %p63 = scmp.eq.s32.totalorder %s22, 0
      %p64 = por %p62, %p63
      %p65 = scmp.ne.s32.totalorder %s53, %s54
      %p66 = scmp.eq.s32.totalorder %s23, 1
      %p67 = por %p65, %p66
      %p69 = scmp.ne.s32.totalorder %s54, %s68
      %p70 = scmp.eq.s32.totalorder %s23, 0
      %p71 = por %p69, %p70
      %s73 = sadd.s32 %s72, 1
      %p76 = scmp.eq.s32.totalorder %s17, 1
      %p77 = scmp.ne.s32.totalorder %s72, %s74
      %p78 = scmp.eq.s32.totalorder %s17, 0
      %p79 = por %p77, %p78
      %p80 = scmp.ne.s32.totalorder %s72, %s74
      %p81 = scmp.eq.s32.totalorder %s22, 1
      %p82 = por %p80, %p81
      %p83 = scmp.ne.s32.totalorder %s74, %s75
      %p84 = scmp.eq.s32.totalorder %s22, 0
      %p85 = por %p83, %p84
      %p86 = scmp.ne.s32.totalorder %s74, %s75
      %p87 = scmp.eq.s32.totalorder %s23, 1
      %p88 = por %p86, %p87
      %p90 = scmp.ne.s32.totalorder %s75, %s89
      %p91 = scmp.eq.s32.totalorder %s23, 0
      %p92 = por %p90, %p91
      %s94 = sadd.s32 %s93, 1
      %p97 = scmp.eq.s32.totalorder %s17, 1
      %p98 = scmp.ne.s32.totalorder %s93, %s95
      %p99 = scmp.eq.s32.totalorder %s17, 0
      %p100 = por %p98, %p99
      %p101 = scmp.ne.s32.totalorder %s93, %s95
      %p102 = scmp.eq.s32.totalorder %s22, 1
      %p103 = por %p101, %p102
      %p104 = scmp.ne.s32.totalorder %s95, %s96
      %p105 = scmp.eq.s32.totalorder %s22, 0
      %p106 = por %p104, %p105
      %p107 = scmp.ne.s32.totalorder %s95, %s96
      %p108 = scmp.eq.s32.totalorder %s23, 1
      %p109 = por %p107, %p108
      %p111 = scmp.ne.s32.totalorder %s96, %s110
      %p112 = scmp.eq.s32.totalorder %s23, 0
      %p113 = por %p111, %p112
      %s115 = sadd.s32 %s114, 1
      %p118 = scmp.eq.s32.totalorder %s17, 1
      %p119 = scmp.ne.s32.totalorder %s114, %s116
      %p120 = scmp.eq.s32.totalorder %s17, 0
      %p121 = por %p119, %p120
      %p122 = scmp.ne.s32.totalorder %s114, %s116
      %p123 = scmp.eq.s32.totalorder %s22, 1
      %p124 = por %p122, %p123
      %p125 = scmp.ne.s32.totalorder %s116, %s117
      %p126 = scmp.eq.s32.totalorder %s22, 0
      %p127 = por %p125, %p126
      %p128 = scmp.ne.s32.totalorder %s116, %s117
      %p129 = scmp.eq.s32.totalorder %s23, 1
      %p130 = por %p128, %p129
      %p132 = scmp.ne.s32.totalorder %s117, %s131
      %p133 = scmp.eq.s32.totalorder %s23, 0
      %p134 = por %p132, %p133
      %s136 = sadd.s32 %s135, 1
      %p139 = scmp.eq.s32.totalorder %s17, 1
      %p140 = scmp.ne.s32.totalorder %s135, %s137
      %p141 = scmp.eq.s32.totalorder %s17, 0
      %p142 = por %p140, %p141
      %p143 = scmp.ne.s32.totalorder %s135, %s137
      %p144 = scmp.eq.s32.totalorder %s22, 1
      %p145 = por %p143, %p144
      %p146 = scmp.ne.s32.totalorder %s137, %s138
      %p147 = scmp.eq.s32.totalorder %s22, 0
      %p148 = por %p146, %p147
      %p149 = scmp.ne.s32.totalorder %s137, %s138
      %p150 = scmp.eq.s32.totalorder %s23, 1
      %p151 = por %p149, %p150
      %p153 = scmp.ne.s32.totalorder %s138, %s152
      %p154 = scmp.eq.s32.totalorder %s23, 0
      %p155 = por %p153, %p154
      %s157 = sadd.s32 %s156, 1
      %p160 = scmp.eq.s32.totalorder %s17, 1
      %p161 = scmp.ne.s32.totalorder %s156, %s158
      %p162 = scmp.eq.s32.totalorder %s17, 0
      %p163 = por %p161, %p162
      %p164 = scmp.ne.s32.totalorder %s156, %s158
      %p165 = scmp.eq.s32.totalorder %s22, 1
      %p166 = por %p164, %p165
      %p167 = scmp.ne.s32.totalorder %s158, %s159
      %p168 = scmp.eq.s32.totalorder %s22, 0
      %p169 = por %p167, %p168
      %p170 = scmp.ne.s32.totalorder %s158, %s159
      %p171 = scmp.eq.s32.totalorder %s23, 1
      %p172 = por %p170, %p171
      %p174 = scmp.ne.s32.totalorder %s159, %s173
      %p175 = scmp.eq.s32.totalorder %s23, 0
      %p176 = por %p174, %p175
      %s177 = ssub.s32 %s17, %s24
      %p178 = scmp.eq.s32.totalorder %s177, 0
      %s180 = sadd.s32 %s179, 1
      %s181 = scalar_select %p178, %s179, %s180
      %p184 = pneg %p178
      %p185 = scmp.eq.s32.totalorder %s17, 1
      %p186 = por %p184, %p185
      %p187 = scmp.ne.s32.totalorder %s179, %s182
      %p188 = scmp.eq.s32.totalorder %s17, 0
      %p189 = por %p187, %p188
      %p190 = scmp.ne.s32.totalorder %s179, %s182
      %p191 = scmp.eq.s32.totalorder %s22, 1
      %p192 = por %p190, %p191
      %p193 = scmp.ne.s32.totalorder %s182, %s183
      %p194 = scmp.eq.s32.totalorder %s22, 0
      %p195 = por %p193, %p194
      %p196 = scmp.ne.s32.totalorder %s182, %s183
      %p197 = scmp.eq.s32.totalorder %s23, 1
      %p198 = por %p196, %p197
      %p200 = scmp.ne.s32.totalorder %s183, %s199
      %p201 = scmp.eq.s32.totalorder %s23, 0
      %p202 = por %p200, %p201
      %p203 = scmp.le.s32.totalorder 1, %s17
      %p204 = scmp.lt.s32.totalorder %s17, 3
      %p205 = pnand %p203, %p204
      %p206 = pneg %p205
      // Predicated region
      $region9: #{is_vacinated_forward.1} parent=5 // pred_check
        _
      $region10: #{is_vacinated_forward.1} parent=5 // pred_check_branch
        %208 = sbr.rel (%p205) target = $region12
      $region11: #{is_vacinated_forward.1} parent=5 // pred_region
        %s209 = ssub.s32 %s17, 1
        // Predicated region
        $region13: #{is_vacinated_forward.1} parent=11 // pred_check
          %p210 = pneg %p64
        $region14: #{is_vacinated_forward.1} parent=11 // pred_check_branch
          %212 = sbr.rel (%p210) target = $region16
        $region15: #{is_vacinated_forward.1} parent=11 // pred_region
          _
        $region16: #{is_vacinated_forward.1} parent=11 // pred_fallthru
          _
        // Predicated region
        $region17: #{is_vacinated_forward.1} parent=11 // pred_check
          %p213 = pneg %p85
        $region18: #{is_vacinated_forward.1} parent=11 // pred_check_branch
          %215 = sbr.rel (%p213) target = $region20
        $region19: #{is_vacinated_forward.1} parent=11 // pred_region
          _
        $region20: #{is_vacinated_forward.1} parent=11 // pred_fallthru
          _
        // Predicated region
        $region21: #{is_vacinated_forward.1} parent=11 // pred_check
          %p216 = pneg %p106
        $region22: #{is_vacinated_forward.1} parent=11 // pred_check_branch
          %218 = sbr.rel (%p216) target = $region24
        $region23: #{is_vacinated_forward.1} parent=11 // pred_region
          _
        $region24: #{is_vacinated_forward.1} parent=11 // pred_fallthru
          _
        // Predicated region
        $region25: #{is_vacinated_forward.1} parent=11 // pred_check
          %p219 = pneg %p127
        $region26: #{is_vacinated_forward.1} parent=11 // pred_check_branch
          %221 = sbr.rel (%p219) target = $region28
        $region27: #{is_vacinated_forward.1} parent=11 // pred_region
          _
        $region28: #{is_vacinated_forward.1} parent=11 // pred_fallthru
          _
        // Predicated region
        $region29: #{is_vacinated_forward.1} parent=11 // pred_check
          %p222 = pneg %p148
        $region30: #{is_vacinated_forward.1} parent=11 // pred_check_branch
          %224 = sbr.rel (%p222) target = $region32
        $region31: #{is_vacinated_forward.1} parent=11 // pred_region
          _
        $region32: #{is_vacinated_forward.1} parent=11 // pred_fallthru
          _
        // Predicated region
        $region33: #{is_vacinated_forward.1} parent=11 // pred_check
          %p225 = pneg %p169
        $region34: #{is_vacinated_forward.1} parent=11 // pred_check_branch
          %227 = sbr.rel (%p225) target = $region36
        $region35: #{is_vacinated_forward.1} parent=11 // pred_region
          _
        $region36: #{is_vacinated_forward.1} parent=11 // pred_fallthru
          _
      $region12: #{is_vacinated_forward.1} parent=5 // pred_fallthru
        _
      %p228 = scmp.lt.s32.totalorder %s17, 2
      // Predicated region
      $region37: #{is_vacinated_forward.1} parent=5 // pred_check
        %p229 = pneg %p228
      $region38: #{is_vacinated_forward.1} parent=5 // pred_check_branch
        %231 = sbr.rel (%p229) target = $region40
      $region39: #{is_vacinated_forward.1} parent=5 // pred_region
        // Predicated region
        $region41: #{is_vacinated_forward.1} parent=39 // pred_check
          %p232 = pneg %p37
        $region42: #{is_vacinated_forward.1} parent=39 // pred_check_branch
          %234 = sbr.rel (%p232) target = $region44
        $region43: #{is_vacinated_forward.1} parent=39 // pred_region
          %s235 = smul.u32 16, %s17
          %p236 = scmp.lt.s32.totalorder %s235, 31
          %s237 = scalar_select %p236, %s235, 31
          %s238 = smul.addr %s237, 4
          %s239 = scalar_lea.vmem %s0, %s238
          %s240 = smul.u32 16, %s17
        $region44: #{is_vacinated_forward.1} parent=39 // pred_fallthru
          _
      $region40: #{is_vacinated_forward.1} parent=5 // pred_fallthru
        _
      %p241 = scmp.le.s32.totalorder 1, %s17
      %p242 = scmp.lt.s32.totalorder %s17, 3
      %p243 = pnand %p241, %p242
      %p244 = pneg %p243
      // Predicated region
      $region45: #{is_vacinated_forward.1} parent=5 // pred_check
        _
      $region46: #{is_vacinated_forward.1} parent=5 // pred_check_branch
        %246 = sbr.rel (%p243) target = $region48
      $region47: #{is_vacinated_forward.1} parent=5 // pred_region
        %s247 = ssub.s32 %s17, 1
        %s248 = smul.u32 16, %s22
        %p249 = scmp.lt.s32.totalorder %s248, 31
        %s250 = scalar_select %p249, %s248, 31
        %s251 = smul.addr %s250, 4
        %s252 = scalar_lea.vmem %s0, %s251
        %p253 = pneg %p43
        %p254 = pneg %p40
        %p255 = pneg %p64
        %p256 = pneg %p61
        %p257 = pneg %p85
        %p258 = pneg %p82
        %p259 = pneg %p106
        %p260 = pneg %p103
        %p261 = pneg %p127
        %p262 = pneg %p124
        %p263 = pneg %p148
        %p264 = pneg %p145
        %p265 = pneg %p169
        %p266 = pneg %p166
        %p267 = pneg %p195
        %p268 = pneg %p192
        %s269 = sand.u32 %s182, 1
        %s270 = scalar_lea.sflag [#allocation4], %s269
        %s271 = sand.u32 %s182, 1
        %s272 = smul.addr %s271, 2
        %s273 = scalar_lea.vmem [#allocation3], %s272
        %s274 = smul.u32 16, %s22
        %p275 = scmp.lt.s32.totalorder %s274, 31
        %s276 = scalar_select %p275, %s274, 31
        %s277 = smul.addr %s276, 4
        %s278 = scalar_lea.vmem %s0, %s277
        %s279 = smul.u32 16, %s22
        %v281 = vld [vmem:[%s1] sm:$0xf]
        %v282 = vld [vmem:[%s1 + $0x4] sm:$0xf]
        %v283 = vld [vmem:[%s1 + $0x8] sm:$0xf]
        %v284 = vld [vmem:[%s1 + $0xc] sm:$0xf]
        %v285 = vld [vmem:[%s1 + $0x10] sm:$0xf]
        %v286 = vld [vmem:[%s1 + $0x14] sm:$0xf]
        %v287 = vld [vmem:[%s1 + $0x18] sm:$0xf]
        %v288 = vld [vmem:[%s1 + $0x1c] sm:$0xf]
        %v289 = vld [vmem:[%s2] sm:$0xff]
        %v290 = vld [vmem:[%s2 + $0x8] sm:$0xff]
        %v291 = vld [vmem:[%s2 + $0x10] sm:$0xff]
        %v292 = vld [vmem:[%s2 + $0x18] sm:$0xff]
        %v293 = vld [vmem:[%s2 + $0x20] sm:$0xff]
        %v294 = vld [vmem:[%s2 + $0x28] sm:$0xff]
        %v295 = vld [vmem:[%s2 + $0x30] sm:$0xff]
        %v296 = vld [vmem:[%s2 + $0x38] sm:$0xff]
        %v297 = vld [vmem:[%s3] sm:$0xf]
        %v298 = vld [vmem:[%s3 + $0x4] sm:$0xf]
        %v299 = vld [vmem:[%s4] sm:$0xff]
        %v300 = vld [vmem:[%s4 + $0x8] sm:$0xff]
        %v301 = vld [vmem:[%s5] sm:$0x1]
        %s302 = sld [smem:[#allocation2]]
        %v303 = vld [vmem:[%s278] sm:$0xf]
        %v304 = vld [vmem:[%s278 + $0x4] sm:$0xf]
        %v305 = vld [vmem:[%s278 + $0x8] sm:$0xf]
        %v306 = vld [vmem:[%s278 + $0xc] sm:$0xf]
        %v307 = vld [vmem:[%s278 + $0x10] sm:$0xf]
        %v308 = vld [vmem:[%s278 + $0x14] sm:$0xf]
        %v309 = vld [vmem:[%s278 + $0x18] sm:$0xf]
        %v310 = vld [vmem:[%s278 + $0x1c] sm:$0xf]
        %v311 = vld [vmem:[%s278 + $0x20] sm:$0xf]
        %v312 = vld [vmem:[%s278 + $0x24] sm:$0xf]
        %v313 = vld [vmem:[%s278 + $0x28] sm:$0xf]
        %v314 = vld [vmem:[%s278 + $0x2c] sm:$0xf]
        %v315 = vld [vmem:[%s278 + $0x30] sm:$0xf]
        %v316 = vld [vmem:[%s278 + $0x34] sm:$0xf]
        %v317 = vld [vmem:[%s278 + $0x38] sm:$0xf]
        %v318 = vld [vmem:[%s278 + $0x3c] sm:$0xf]
        %320 = vset.pattern.permute.xlu0 0
        %321 = vperm.xlu0 %320, %v289
        %v322 = vpop.permute.xlu0 %321
        %325 = vset.pattern.permute.xlu0 0
        %326 = vperm.xlu0 %325, %v290
        %v327 = vpop.permute.xlu0 %326
        %330 = vset.pattern.permute.xlu0 0
        %331 = vperm.xlu0 %330, %v291
        %v332 = vpop.permute.xlu0 %331
        %335 = vset.pattern.permute.xlu0 0
        %336 = vperm.xlu0 %335, %v292
        %v337 = vpop.permute.xlu0 %336
        %340 = vset.pattern.permute.xlu0 0
        %341 = vperm.xlu0 %340, %v293
        %v342 = vpop.permute.xlu0 %341
        %345 = vset.pattern.permute.xlu0 0
        %346 = vperm.xlu0 %345, %v294
        %v347 = vpop.permute.xlu0 %346
        %350 = vset.pattern.permute.xlu0 0
        %351 = vperm.xlu0 %350, %v295
        %v352 = vpop.permute.xlu0 %351
        %355 = vset.pattern.permute.xlu0 0
        %356 = vperm.xlu0 %355, %v296
        %v357 = vpop.permute.xlu0 %356
        %v367 = vunpack.c.l.b16 %v281
        %v368 = vunpack.c.l.b16 %v282
        %v369 = vunpack.c.l.b16 %v283
        %v370 = vunpack.c.l.b16 %v284
        %v371 = vunpack.c.l.b16 %v285
        %v372 = vunpack.c.l.b16 %v286
        %v373 = vunpack.c.l.b16 %v287
        %v374 = vunpack.c.l.b16 %v288
        %v375 = vpack.c.b16 %v368, %v367
        %v376 = vpack.c.b16 %v370, %v369
        %v377 = vpack.c.b16 %v372, %v371
        %v378 = vpack.c.b16 %v374, %v373
        %v395 = vunpack.c.l.b16 %v303
        %v396 = vunpack.c.l.b16 %v304
        %v397 = vunpack.c.l.b16 %v305
        %v398 = vunpack.c.l.b16 %v306
        %v399 = vunpack.c.l.b16 %v307
        %v400 = vunpack.c.l.b16 %v308
        %v401 = vunpack.c.l.b16 %v309
        %v402 = vunpack.c.l.b16 %v310
        %v403 = vunpack.c.l.b16 %v311
        %v404 = vunpack.c.l.b16 %v312
        %v405 = vunpack.c.l.b16 %v313
        %v406 = vunpack.c.l.b16 %v314
        %v407 = vunpack.c.l.b16 %v315
        %v408 = vunpack.c.l.b16 %v316
        %v409 = vunpack.c.l.b16 %v317
        %v410 = vunpack.c.l.b16 %v318
        %v411 = vpack.c.b16 %v396, %v395
        %v412 = vpack.c.b16 %v398, %v397
        %v413 = vpack.c.b16 %v400, %v399
        %v414 = vpack.c.b16 %v402, %v401
        %v415 = vpack.c.b16 %v404, %v403
        %v416 = vpack.c.b16 %v406, %v405
        %v417 = vpack.c.b16 %v408, %v407
        %v418 = vpack.c.b16 %v410, %v409
        %vm419 = vcmask 261120
        %v421 = vsel %vm419, %v375, 0
        %v424 = vsel %vm419, %v376, 0
        %v427 = vsel %vm419, %v377, 0
        %v430 = vsel %vm419, %v378, 0
        %v433 = vsel %vm419, %v411, 0
        %v436 = vsel %vm419, %v412, 0
        %v439 = vsel %vm419, %v413, 0
        %v442 = vsel %vm419, %v414, 0
        %v445 = vsel %vm419, %v415, 0
        %v448 = vsel %vm419, %v416, 0
        %v451 = vsel %vm419, %v417, 0
        %v454 = vsel %vm419, %v418, 0
        %456 = vmatprep.subr.bf16.mxu0 0
        %457 = vmatpush1.bf16.xpose.msra.mxu0 %v454
        %458 = vmatprep.subr.bf16.mxu0 0
        %459 = vmatpush1.bf16.xpose.msra.mxu0 %v451
        %460 = vmatprep.subr.bf16.mxu0 0
        %461 = vmatpush1.bf16.xpose.msra.mxu0 %v448
        %462 = vmatprep.subr.bf16.mxu0 0
        %463 = vmatpush1.bf16.xpose.msra.mxu0 %v445
        %464 = vmatprep.subr.bf16.mxu0 0
        %465 = vmatpush1.bf16.xpose.msra.mxu0 %v442
        %466 = vmatprep.subr.bf16.mxu0 0
        %467 = vmatpush1.bf16.xpose.msra.mxu0 %v439
        %468 = vmatprep.subr.bf16.mxu0 0
        %469 = vmatpush1.bf16.xpose.msra.mxu0 %v436
        %470 = vmatprep.subr.bf16.mxu0 0
        %471 = vmatpush1.bf16.xpose.msra.mxu0 %v433
        %472 = vmatprep.subr.bf16.mxu0 0
        %473 = vmatpush2.bf16.xpose.msra.mxu0 0
        %474 = vmatprep.subr.bf16.mxu0 0
        %475 = vmatpush2.bf16.xpose.msra.mxu0 0
        %476 = vmatprep.subr.bf16.mxu0 0
        %477 = vmatpush2.bf16.xpose.msra.mxu0 0
        %478 = vmatprep.subr.bf16.mxu0 0
        %479 = vmatpush2.bf16.xpose.msra.mxu0 0
        %480 = vmatprep.subr.bf16.mxu0 0
        %481 = vmatpush2.bf16.xpose.msra.mxu0 0
        %482 = vmatprep.subr.bf16.mxu0 0
        %483 = vmatpush2.bf16.xpose.msra.mxu0 0
        %484 = vmatprep.subr.bf16.mxu0 0
        %485 = vmatpush2.bf16.xpose.msra.mxu0 0
        %486 = vmatprep.subr.bf16.mxu0 0
        %487 = vmatpush2.bf16.xpose.msra.mxu0 0
        %488 = vmatprep.mubr.bf16.mxu0 0
        %489 = vmatmul.mubr.bf16.gmra.mxu0 %v421
        %v490 = vpop.f32.mrf.mxu0
        %v491 = vadd.f32 %v322, %v490
        %v492 = vpop.f32.mrf.mxu0
        %v493 = vpop.f32.mrf.mxu0
        %v494 = vadd.f32 %v327, %v493
        %v495 = vpop.f32.mrf.mxu0
        %496 = vmatprep.mubr.bf16.mxu0 0
        %497 = vmatmul.mubr.bf16.gmra.mxu0 %v424
        %v498 = vpop.f32.mrf.mxu0
        %v499 = vadd.f32 %v332, %v498
        %v500 = vpop.f32.mrf.mxu0
        %v501 = vpop.f32.mrf.mxu0
        %v502 = vadd.f32 %v337, %v501
        %v503 = vpop.f32.mrf.mxu0
        %504 = vmatprep.mubr.bf16.mxu0 0
        %505 = vmatmul.mubr.bf16.gmra.mxu0 %v427
        %v506 = vpop.f32.mrf.mxu0
        %v507 = vadd.f32 %v342, %v506
        %v508 = vpop.f32.mrf.mxu0
        %v509 = vpop.f32.mrf.mxu0
        %v510 = vadd.f32 %v347, %v509
        %v511 = vpop.f32.mrf.mxu0
        %512 = vmatprep.mubr.bf16.mxu0 0
        %513 = vmatmul.mubr.bf16.gmra.mxu0 %v430
        %v514 = vpop.f32.mrf.mxu0
        %v515 = vadd.f32 %v352, %v514
        %v516 = vpop.f32.mrf.mxu0
        %v517 = vpop.f32.mrf.mxu0
        %v518 = vadd.f32 %v357, %v517
        %v519 = vpop.f32.mrf.mxu0
        %520 = vdwg.mxu0
        %vm521 = vcmp.gt.f32.partialorder %v491, 0.0
        %vm522 = vcmp.gt.f32.partialorder %v494, 0.0
        %vm523 = vcmp.gt.f32.partialorder %v499, 0.0
        %vm524 = vcmp.gt.f32.partialorder %v502, 0.0
        %vm525 = vcmp.gt.f32.partialorder %v507, 0.0
        %vm526 = vcmp.gt.f32.partialorder %v510, 0.0
        %vm527 = vcmp.gt.f32.partialorder %v515, 0.0
        %vm528 = vcmp.gt.f32.partialorder %v518, 0.0
        %v529 = vmul.f32 %v491, 0.01
        %v530 = vmul.f32 %v494, 0.01
        %v531 = vmul.f32 %v499, 0.01
        %v532 = vmul.f32 %v502, 0.01
        %v533 = vmul.f32 %v507, 0.01
        %v534 = vmul.f32 %v510, 0.01
        %v535 = vmul.f32 %v515, 0.01
        %v536 = vmul.f32 %v518, 0.01
        %v537 = vsel %vm521, %v491, %v529
        %v538 = vsel %vm522, %v494, %v530
        %v539 = vsel %vm523, %v499, %v531
        %v540 = vsel %vm524, %v502, %v532
        %v541 = vsel %vm525, %v507, %v533
        %v542 = vsel %vm526, %v510, %v534
        %v543 = vsel %vm527, %v515, %v535
        %v544 = vsel %vm528, %v518, %v536
        %v545 = vpack.c.bf16 %v538, %v537
        %v546 = vpack.c.bf16 %v540, %v539
        %v547 = vpack.c.bf16 %v542, %v541
        %v548 = vpack.c.bf16 %v544, %v543
        %550 = vset.pattern.permute.xlu0 0
        %551 = vperm.xlu0 %550, %v299
        %v552 = vpop.permute.xlu0 %551
        %555 = vset.pattern.permute.xlu0 0
        %556 = vperm.xlu0 %555, %v300
        %v557 = vpop.permute.xlu0 %556
        %v561 = vunpack.c.l.b16 %v297
        %v562 = vunpack.c.l.b16 %v298
        %v563 = vpack.c.b16 %v562, %v561
        %vm564 = vcmask 523264
        %v566 = vsel %vm564, %v563, 0
        %568 = vmatprep.subr.bf16.mxu0 0
        %569 = vmatpush1.bf16.msra.mxu0 0
        %570 = vmatprep.subr.bf16.mxu0 0
        %571 = vmatpush1.bf16.msra.mxu0 0
        %572 = vmatprep.subr.bf16.mxu0 0
        %573 = vmatpush1.bf16.msra.mxu0 0
        %574 = vmatprep.subr.bf16.mxu0 0
        %575 = vmatpush1.bf16.msra.mxu0 0
        %576 = vmatprep.subr.bf16.mxu0 0
        %577 = vmatpush1.bf16.msra.mxu0 %v548
        %578 = vmatprep.subr.bf16.mxu0 0
        %579 = vmatpush1.bf16.msra.mxu0 %v547
        %580 = vmatprep.subr.bf16.mxu0 0
        %581 = vmatpush1.bf16.msra.mxu0 %v546
        %582 = vmatprep.subr.bf16.mxu0 0
        %583 = vmatpush1.bf16.msra.mxu0 %v545
        %584 = vmatprep.subr.bf16.mxu0 0
        %585 = vmatpush2.bf16.msra.mxu0 0
        %586 = vmatprep.subr.bf16.mxu0 0
        %587 = vmatpush2.bf16.msra.mxu0 0
        %588 = vmatprep.subr.bf16.mxu0 0
        %589 = vmatpush2.bf16.msra.mxu0 0
        %590 = vmatprep.subr.bf16.mxu0 0
        %591 = vmatpush2.bf16.msra.mxu0 0
        %592 = vmatprep.subr.bf16.mxu0 0
        %593 = vmatpush2.bf16.msra.mxu0 0
        %594 = vmatprep.subr.bf16.mxu0 0
        %595 = vmatpush2.bf16.msra.mxu0 0
        %596 = vmatprep.subr.bf16.mxu0 0
        %597 = vmatpush2.bf16.msra.mxu0 0
        %598 = vmatprep.subr.bf16.mxu0 0
        %599 = vmatpush2.bf16.msra.mxu0 0
        %600 = vmatprep.mubr.bf16.mxu0 0
        %601 = vmatmul.mubr.bf16.gmra.mxu0 %v566
        %v602 = vpop.f32.mrf.mxu0
        %v603 = vadd.f32 %v552, %v602
        %v604 = vpop.f32.mrf.mxu0
        %v605 = vpop.f32.mrf.mxu0
        %v606 = vadd.f32 %v557, %v605
        %v607 = vpop.f32.mrf.mxu0
        %608 = vdwg.mxu0
        %vm609 = vcmp.gt.f32.partialorder %v603, 0.0
        %vm610 = vcmp.gt.f32.partialorder %v606, 0.0
        %v611 = vmul.f32 %v603, 0.01
        %v612 = vmul.f32 %v606, 0.01
        %v613 = vsel %vm609, %v603, %v611
        %v614 = vsel %vm610, %v606, %v612
        %v615 = vpack.c.bf16 %v614, %v613
        %v616 = vstv %s302
        %vm617 = vcmask 130048
        %v619 = vsel %vm617, %v301, 0
        %621 = vmatprep.subr.bf16.mxu0 0
        %622 = vmatpush1.bf16.msra.mxu0 0
        %623 = vmatprep.subr.bf16.mxu0 0
        %624 = vmatpush1.bf16.msra.mxu0 0
        %625 = vmatprep.subr.bf16.mxu0 0
        %626 = vmatpush1.bf16.msra.mxu0 0
        %627 = vmatprep.subr.bf16.mxu0 0
        %628 = vmatpush1.bf16.msra.mxu0 0
        %629 = vmatprep.subr.bf16.mxu0 0
        %630 = vmatpush1.bf16.msra.mxu0 0
        %631 = vmatprep.subr.bf16.mxu0 0
        %632 = vmatpush1.bf16.msra.mxu0 0
        %633 = vmatprep.subr.bf16.mxu0 0
        %634 = vmatpush1.bf16.msra.mxu0 0
        %635 = vmatprep.subr.bf16.mxu0 0
        %636 = vmatpush1.bf16.msra.mxu0 %v615
        %637 = vmatprep.subr.bf16.mxu0 0
        %638 = vmatpush2.bf16.msra.mxu0 0
        %639 = vmatprep.subr.bf16.mxu0 0
        %640 = vmatpush2.bf16.msra.mxu0 0
        %641 = vmatprep.subr.bf16.mxu0 0
        %642 = vmatpush2.bf16.msra.mxu0 0
        %643 = vmatprep.subr.bf16.mxu0 0
        %644 = vmatpush2.bf16.msra.mxu0 0
        %645 = vmatprep.subr.bf16.mxu0 0
        %646 = vmatpush2.bf16.msra.mxu0 0
        %647 = vmatprep.subr.bf16.mxu0 0
        %648 = vmatpush2.bf16.msra.mxu0 0
        %649 = vmatprep.subr.bf16.mxu0 0
        %650 = vmatpush2.bf16.msra.mxu0 0
        %651 = vmatprep.subr.bf16.mxu0 0
        %652 = vmatpush2.bf16.msra.mxu0 0
        %653 = vmatprep.mubr.bf16.mxu0 0
        %654 = vmatmul.mubr.bf16.gmra.mxu0 %v619
        %v655 = vpop.f32.mrf.mxu0
        %v656 = vadd.f32 %v616, %v655
        %v657 = vpop.f32.mrf.mxu0
        %v658 = vpop.f32.mrf.mxu0
        %v659 = vpop.f32.mrf.mxu0
        %660 = vdwg.mxu0
        %v661 = vsub.f32 0.0, %v656
        %v662 = vmul.f32 %v661, 1.442695
        %v663 = vpow.pop %v662
        %v664 = vadd.f32 %v663, 1.0
        %v665 = vrcp.pop %v664
        %v666 = vmul.f32 1.0, %v665
        %v667 = vmul.f32 %v656, 1.442695
        %v668 = vpow.pop %v667
        %v669 = vadd.f32 %v668, 1.0
        %v670 = vrcp.pop %v669
        %v671 = vmul.f32 1.0, %v670
        %v673 = vrot.slane %v666, 7
        %vm675 = vcmask 1040384
        %v676 = vsel %vm675, %v671, %v673
        %677 = vst [vmem:[%s273] sm:$0x3] %v676
        %s678 = sand.u32 %s182, 1
        %s679 = scalar_lea.sflag [#allocation4], %s678
        %s680 = sand.u32 %s182, 1
        %s681 = smul.addr %s680, 2
        %s682 = scalar_lea.vmem [#allocation3], %s681
        // Predicated region
        $region49: #{is_vacinated_forward.1} parent=47 // pred_check
          %p683 = pneg %p192
        $region50: #{is_vacinated_forward.1} parent=47 // pred_check_branch
          %685 = sbr.rel (%p683) target = $region52
        $region51: #{is_vacinated_forward.1} parent=47 // pred_region
          %s687 = ssub.s32 32, 32
          %688 = vsyncadd %s679, %s687
          %s689 = smul.addr %s22, 32
          %s690 = scalar_lea.hbm %s7, %s689
          %s692 = sshll.u32 %s682, 4
          %s693 = int_to_ptr.vmem [resolvable:$true] %s692
          %695 = dma.vmem_to_hbm [thread:$0]  %s693, 32, %s690, %s679
        $region52: #{is_vacinated_forward.1} parent=47 // pred_fallthru
          _
      $region48: #{is_vacinated_forward.1} parent=5 // pred_fallthru
        _
      %p696 = scmp.le.s32.totalorder 2, %s17
      // Predicated region
      $region53: #{is_vacinated_forward.1} parent=5 // pred_check
        %p697 = pneg %p696
      $region54: #{is_vacinated_forward.1} parent=5 // pred_check_branch
        %699 = sbr.rel (%p697) target = $region56
      $region55: #{is_vacinated_forward.1} parent=5 // pred_region
        %s700 = ssub.s32 %s17, 2
        // Predicated region
        $region57: #{is_vacinated_forward.1} parent=55 // pred_check
          %p701 = pneg %p198
        $region58: #{is_vacinated_forward.1} parent=55 // pred_check_branch
          %703 = sbr.rel (%p701) target = $region60
        $region59: #{is_vacinated_forward.1} parent=55 // pred_region
          %s704 = sand.u32 %s183, 1
          %s705 = scalar_lea.sflag [#allocation4], %s704
          %s706 = sand.u32 %s183, 1
          %s707 = smul.addr %s706, 2
          %s708 = scalar_lea.vmem [#allocation3], %s707
          %709 = dma.done %s705, 32
        $region60: #{is_vacinated_forward.1} parent=55 // pred_fallthru
          _
      $region56: #{is_vacinated_forward.1} parent=5 // pred_fallthru
        _
    $region6: #{is_vacinated_forward.1} parent=1 // loop_footer
      %s21 = sadd.s32 1, %s17
    $region7: #{is_vacinated_forward.1} parent=1 // loop_footer_branch
      %16 = sbr.rel target = $region3
    $region8: #{is_vacinated_forward.1} parent=1 // loop_exit
      _
    %710 = vsyncpa [#allocation4], 1
    %s711 = scalar_lea.sflag [#allocation4], 1
    %712 = vsyncpa %s711, 1

</llo_original>
